<compile_context>
chip_gen: v6e
topology: v6e:2x2x1
jax: 0.10.0
libtpu: 0.0.40
codegen_flags: <defaults>
</compile_context>

<pallas_src>
import jax
import jax.numpy as jnp
import numpy as np
from jax.experimental import pallas as pl
from jax.experimental.pallas import tpu as pltpu

_EPS = 1e-5


# --------------------------------------------------------------------------- in-kernel helpers
def _bn(y, g, be):
    # training-mode BatchNorm1d over rows (biased variance), f32 math.
    m = jnp.mean(y, axis=0, keepdims=True)
    v = jnp.mean(jnp.square(y - m), axis=0, keepdims=True)
    return (y - m) * jax.lax.rsqrt(v + _EPS) * g + be


def _bn_relu(y, g, be):
    return jnp.maximum(_bn(y, g, be), 0.0)


# ----------------------------------------------------------------------------------- kernels
def _head_kernel(x_ref, w1_ref, b1_ref, g1_ref, be1_ref,
                 w2_ref, b2_ref, g2_ref, be2_ref,
                 w3_ref, b3_ref, o_ref):
    # first_mlp + lin32, fully fused; intermediates stay in vregs/VMEM.
    x = x_ref[...]                                        # (M, 3) f32
    w1 = w1_ref[...]                                      # (3, 32) f32

    # Conv1d(3,32,k=1): Cin=3 -> 3 VPU broadcast FMAs (keep the K=3 contraction off the MXU).
    y = (x[:, 0:1] * w1[0:1, :]
         + x[:, 1:2] * w1[1:2, :]
         + x[:, 2:3] * w1[2:3, :]) + b1_ref[...]
    h = _bn_relu(y, g1_ref[...], be1_ref[...])            # (M, 32) f32

    # Conv1d(32,32,k=1) + BN + ReLU : bf16 MXU dot, f32 accumulation.
    y = jnp.dot(h.astype(jnp.bfloat16), w2_ref[...],
                preferred_element_type=jnp.float32) + b2_ref[...]
    h = _bn_relu(y, g2_ref[...], be2_ref[...])

    # Linear(32,32) + ReLU.
    y = jnp.dot(h.astype(jnp.bfloat16), w3_ref[...],
                preferred_element_type=jnp.float32) + b3_ref[...]
    o_ref[...] = jnp.maximum(y, 0.0)


def _tail_kernel(x_ref,
                 wr_ref, br_ref, gr_ref, ber_ref,
                 wf1_ref, bf1_ref, gf1_ref, bef1_ref,
                 wf2_ref, bf2_ref, gf2_ref, bef2_ref,
                 r_ref, pool_ref, f_ref):
    # ResidualPoint(128) + MaxPool row-reduction + final_mlp, fused; rows layout (M=B*L, 128).
    x = x_ref[...]                                        # (M, 128) f32
    wr = wr_ref[...]                                      # (128, 128) bf16 (shared conv weight)
    br, gr, ber = br_ref[...], gr_ref[...], ber_ref[...]  # per-channel vectors loaded once

    def conv_bn(h):
        y = jnp.dot(h.astype(jnp.bfloat16), wr,
                    preferred_element_type=jnp.float32) + br
        return _bn(y, gr, ber)

    # ResidualPoint: SAME conv + SAME BN (stats recomputed on current input) applied twice.
    out = jnp.maximum(conv_bn(x), 0.0)
    out = conv_bn(out)
    r = jnp.maximum(x + out, 0.0)
    r_ref[...] = r

    # MaxPool2d((1, 8), stride=8), row-group part: max over 8 consecutive rows (the L axis).
    # Lane-dense (G, 128) output; the tiny stride-8 channel subsample is done in the wrapper.
    M, C = r.shape
    pool_ref[...] = jnp.max(r.reshape(M // 8, 8, C), axis=1)

    # final_mlp: Conv1d(128,128)+BN+ReLU, Conv1d(128,40->padded 128)+BN+ReLU.
    y = jnp.dot(r.astype(jnp.bfloat16), wf1_ref[...],
                preferred_element_type=jnp.float32) + bf1_ref[...]
    h = _bn_relu(y, gf1_ref[...], bef1_ref[...])
    y = jnp.dot(h.astype(jnp.bfloat16), wf2_ref[...],
                preferred_element_type=jnp.float32) + bf2_ref[...]
    f_ref[...] = _bn_relu(y, gf2_ref[...], bef2_ref[...])  # (M, 128), first 40 channels valid


# ---------------------------------------------------------------------------------- wrappers
def _fullspec(shape):
    n = len(shape)
    return pl.BlockSpec(shape, lambda i, _n=n: (0,) * _n)


_CPARAMS = pltpu.CompilerParams(dimension_semantics=("arbitrary",))


def _head_call(x, prep):
    w1, b1, g1, be1 = prep["fm1"]
    w2, b2, g2, be2 = prep["fm2"]
    w3, b3 = prep["lin32"]
    args = (x, w1, b1, g1, be1, w2, b2, g2, be2, w3, b3)
    M = x.shape[0]
    return pl.pallas_call(
        _head_kernel,
        grid=(1,),
        in_specs=[_fullspec(a.shape) for a in args],
        out_specs=_fullspec((M, 32)),
        out_shape=jax.ShapeDtypeStruct((M, 32), jnp.float32),
        compiler_params=_CPARAMS,
    )(*args)


def _tail_call(rows, prep):
    wr, br, gr, ber = prep["res"]
    w1, b1, g1, be1 = prep["fin1"]
    w2, b2, g2, be2 = prep["fin2"]
    args = (rows, wr, br, gr, ber, w1, b1, g1, be1, w2, b2, g2, be2)
    M, C = rows.shape
    out_shape = (jax.ShapeDtypeStruct((M, C), jnp.float32),       # residual output (rows)
                 jax.ShapeDtypeStruct((M // 8, C), jnp.float32),  # pool row-group max (lane-dense)
                 jax.ShapeDtypeStruct((M, 128), jnp.float32))     # final_mlp output (padded 128)
    return pl.pallas_call(
        _tail_kernel,
        grid=(1,),
        in_specs=[_fullspec(a.shape) for a in args],
        out_specs=tuple(_fullspec(s.shape) for s in out_shape),
        out_shape=out_shape,
        compiler_params=_CPARAMS,
    )(*args)


@jax.jit
def residual_transformer_head(x_nd, prep):
    # x_nd: (N, D=3) points, channels last. One fused kernel for first_mlp + lin32.
    # TODO(synk): transformer1/2/3, transitionDown1/2 and lin64/lin128 form the undefined
    # 32->64->128 trunk (PointTransformerBlock / TransitionDown not in the source) and cannot
    # be reproduced; the chain stops after lin32.
    return _head_call(x_nd, prep)


@jax.jit
def residual_transformer_tail(feat_ncl, prep):
    # feat_ncl: (B, 128, L) stand-in for the undefined trunk output (PyTorch NCL).
    # Rows layout is kept end-to-end; single transpose in (NCL input) and out (NCL output).
    B, C, L = feat_ncl.shape
    assert C == 128 and L % 8 == 0 and (B * L) % 8 == 0
    rows = jnp.transpose(feat_ncl, (0, 2, 1)).reshape(B * L, C)
    r_rows, rowmax, f_pad = _tail_call(rows, prep)

    # Finish MaxPool2d((1,8), stride=8): stride-8 channel subsample of the lane-dense row-max.
    Lo, Co = L // 8, (C - 1) // 8 + 1
    pooled = rowmax[:, ::8].reshape(B, Lo, Co).transpose(0, 2, 1)          # (B, 16, L//8)
    # TODO(synk): in the original forward residual/max_pool are chained twice before final_mlp,
    # but the pool reduces channels 128->16 which is shape-inconsistent with ResidualPoint(128);
    # that graph cannot run, so final_mlp is applied to the residual output (as before).
    final = f_pad[:, :40].reshape(B, L, 40).transpose(0, 2, 1)             # (B, 40, L)
    return r_rows, pooled, final


# ------------------------------------------------------------------------------------ params
def _mk(key, shape, scale=0.1):
    return scale * jax.random.normal(key, shape, dtype=jnp.float32)


def init_params(key):
    ks = jax.random.split(key, 16)
    p = {}
    # first_mlp: Conv1d(3,32,1)+BN(32)+ReLU, Conv1d(32,32,1)+BN(32)+ReLU
    p["fm1"] = (_mk(ks[0], (32, 3, 1)), _mk(ks[1], (32,)), jnp.ones(32), jnp.zeros(32))
    p["fm2"] = (_mk(ks[2], (32, 32, 1)), _mk(ks[3], (32,)), jnp.ones(32), jnp.zeros(32))
    # lin32 / lin64 / lin128 (lin64/lin128 unused: trunk undefined)
    p["lin32"] = (_mk(ks[4], (32, 32)), _mk(ks[5], (32,)))
    p["lin64"] = (_mk(ks[6], (64, 64)), _mk(ks[7], (64,)))
    p["lin128"] = (_mk(ks[8], (128, 128)), _mk(ks[9], (128,)))
    # ResidualPoint(128): one shared Conv1d(128,128,1) + one shared BN(128)
    p["res"] = (_mk(ks[10], (128, 128, 1)), _mk(ks[11], (128,)), jnp.ones(128), jnp.zeros(128))
    # final_mlp: Conv1d(128,128,1)+BN+ReLU, Conv1d(128,40,1)+BN+ReLU
    p["fin1"] = (_mk(ks[12], (128, 128, 1)), _mk(ks[13], (128,)), jnp.ones(128), jnp.zeros(128))
    p["fin2"] = (_mk(ks[14], (40, 128, 1)), _mk(ks[15], (40,)), jnp.ones(40), jnp.zeros(40))
    return p


def _row(v):
    return jnp.asarray(v, jnp.float32)[None, :]


def prepare_params(p):
    # One-time parameter prep: pre-transposed (Cin, Cout) weights (bf16 for MXU stages),
    # (1, C) f32 bias/gamma/beta, fin2 zero-padded 40->128 for lane-dense stores.
    prep = {}
    w, b, g, be = p["fm1"]
    prep["fm1"] = (jnp.asarray(w, jnp.float32)[:, :, 0].T, _row(b), _row(g), _row(be))
    w, b, g, be = p["fm2"]
    prep["fm2"] = (jnp.asarray(w, jnp.float32)[:, :, 0].T.astype(jnp.bfloat16),
                   _row(b), _row(g), _row(be))
    w, b = p["lin32"]
    prep["lin32"] = (jnp.asarray(w, jnp.float32).T.astype(jnp.bfloat16), _row(b))
    for name in ("res", "fin1"):
        w, b, g, be = p[name]
        prep[name] = (jnp.asarray(w, jnp.float32)[:, :, 0].T.astype(jnp.bfloat16),
                      _row(b), _row(g), _row(be))
    w, b, g, be = p["fin2"]
    wt = jnp.asarray(w, jnp.float32)[:, :, 0].T                     # (128, 40)
    pad = 128 - wt.shape[1]
    prep["fin2"] = (jnp.pad(wt, ((0, 0), (0, pad))).astype(jnp.bfloat16),
                    _row(jnp.pad(jnp.asarray(b, jnp.float32), (0, pad))),
                    _row(jnp.pad(jnp.asarray(g, jnp.float32), (0, pad), constant_values=1.0)),
                    _row(jnp.pad(jnp.asarray(be, jnp.float32), (0, pad))))
    return prep


# -------------------------------------------------------------------------------- references
def _q(a):
    # bf16 rounding (to mirror the kernel's bf16 MXU operands in the f32 numpy reference).
    return np.asarray(jnp.asarray(a, jnp.float32).astype(jnp.bfloat16).astype(jnp.float32))


def _ref_bn(y, g, be):
    m = y.mean(0, keepdims=True)
    v = ((y - m) ** 2).mean(0, keepdims=True)
    return (y - m) / np.sqrt(v + _EPS) * g[None, :] + be[None, :]


def _ref_bn_relu(y, g, be):
    return np.maximum(_ref_bn(y, g, be), 0.0)


def _ref_head(x, p):
    w, b, g, be = [np.asarray(a, np.float32) for a in p["fm1"]]
    h = _ref_bn_relu(x @ w[:, :, 0].T + b[None, :], g, be)
    w, b, g, be = [np.asarray(a, np.float32) for a in p["fm2"]]
    h = _ref_bn_relu(_q(h) @ _q(w[:, :, 0].T) + b[None, :], g, be)
    w, b = [np.asarray(a, np.float32) for a in p["lin32"]]
    return np.maximum(_q(h) @ _q(w.T) + b[None, :], 0.0)


def _ref_tail(rows, p):
    x = np.asarray(rows, np.float32)
    w, b, g, be = [np.asarray(a, np.float32) for a in p["res"]]
    W = _q(w[:, :, 0].T)

    def conv_bn(h):
        return _ref_bn(_q(h) @ W + b[None, :], g, be)

    out = np.maximum(conv_bn(x), 0.0)
    out = conv_bn(out)
    r = np.maximum(x + out, 0.0)
    M, C = r.shape
    pooled_rows = r.reshape(M // 8, 8, C).max(1)[:, ::8]            # (B*Lo, 16)
    w, b, g, be = [np.asarray(a, np.float32) for a in p["fin1"]]
    h = _ref_bn_relu(_q(r) @ _q(w[:, :, 0].T) + b[None, :], g, be)
    w, b, g, be = [np.asarray(a, np.float32) for a in p["fin2"]]
    f = _ref_bn_relu(_q(h) @ _q(w[:, :, 0].T) + b[None, :], g, be)  # (M, 40)
    return r, pooled_rows, f


# -------------------------------------------------------------------------------------- main
if __name__ == "__main__":
    key = jax.random.PRNGKey(0)
    kx, kf, kp = jax.random.split(key, 3)
    params = init_params(kp)
    prep = prepare_params(params)

    # Head input: (N, D) = (64, 3) point cloud (small version of N=1024, D=3).
    x = jax.random.normal(kx, (64, 3), dtype=jnp.float32)
    head_out = jax.block_until_ready(residual_transformer_head(x, prep))

    # 128-channel feature tensor for the tail blocks, (B, C, L) = (2, 128, 16).
    feat = jax.random.normal(kf, (2, 128, 16), dtype=jnp.float32)
    r_rows, pooled, final = jax.block_until_ready(residual_transformer_tail(feat, prep))

    # Correctness checks against pure-numpy references (bf16 rounding mirrored on dot operands).
    TOL = dict(rtol=1e-2, atol=1e-2)
    np.testing.assert_allclose(np.asarray(head_out), _ref_head(np.asarray(x), params), **TOL)

    B, C, L = feat.shape
    rows_np = np.transpose(np.asarray(feat), (0, 2, 1)).reshape(B * L, C)
    ref_r, ref_pooled_rows, ref_f = _ref_tail(rows_np, params)
    np.testing.assert_allclose(np.asarray(r_rows), ref_r, **TOL)
    ref_pooled = ref_pooled_rows.reshape(B, L // 8, 16).transpose(0, 2, 1)
    np.testing.assert_allclose(np.asarray(pooled), ref_pooled, **TOL)
    ref_final = ref_f.reshape(B, L, 40).transpose(0, 2, 1)
    np.testing.assert_allclose(np.asarray(final), ref_final, **TOL)

    assert head_out.shape == (64, 32)
    assert pooled.shape == (2, 16, 2)
    assert final.shape == (2, 40, 16)
    print("KERNEL_OK")
</pallas_src>

<mosaic_0001>
module attributes {stable_mosaic.version = 11 : i64} {
  func.func @_head_kernel(%arg0: i32, %arg1: memref<64x3xf32, #tpu.memory_space<vmem>>, %arg2: memref<3x32xf32, #tpu.memory_space<vmem>>, %arg3: memref<1x32xf32, #tpu.memory_space<vmem>>, %arg4: memref<1x32xf32, #tpu.memory_space<vmem>>, %arg5: memref<1x32xf32, #tpu.memory_space<vmem>>, %arg6: memref<32x32xbf16, #tpu.memory_space<vmem>>, %arg7: memref<1x32xf32, #tpu.memory_space<vmem>>, %arg8: memref<1x32xf32, #tpu.memory_space<vmem>>, %arg9: memref<1x32xf32, #tpu.memory_space<vmem>>, %arg10: memref<32x32xbf16, #tpu.memory_space<vmem>>, %arg11: memref<1x32xf32, #tpu.memory_space<vmem>>, %arg12: memref<64x32xf32, #tpu.memory_space<vmem>>) attributes {dimension_semantics = [#tpu.dimension_semantics<arbitrary>], iteration_bounds = array<i64: 1>, scalar_prefetch = 0 : i64, scratch_operands = 0 : i64, tpu.core_type = #tpu.core_type<tc>, window_params = [{pipeline_mode = #tpu.pipeline_mode<synchronous>, transform_indices = @transform_0, window_bounds = array<i64: 64, 3>}, {pipeline_mode = #tpu.pipeline_mode<synchronous>, transform_indices = @transform_1, window_bounds = array<i64: 3, 32>}, {pipeline_mode = #tpu.pipeline_mode<synchronous>, transform_indices = @transform_2, window_bounds = array<i64: 1, 32>}, {pipeline_mode = #tpu.pipeline_mode<synchronous>, transform_indices = @transform_3, window_bounds = array<i64: 1, 32>}, {pipeline_mode = #tpu.pipeline_mode<synchronous>, transform_indices = @transform_4, window_bounds = array<i64: 1, 32>}, {pipeline_mode = #tpu.pipeline_mode<synchronous>, transform_indices = @transform_5, window_bounds = array<i64: 32, 32>}, {pipeline_mode = #tpu.pipeline_mode<synchronous>, transform_indices = @transform_6, window_bounds = array<i64: 1, 32>}, {pipeline_mode = #tpu.pipeline_mode<synchronous>, transform_indices = @transform_7, window_bounds = array<i64: 1, 32>}, {pipeline_mode = #tpu.pipeline_mode<synchronous>, transform_indices = @transform_8, window_bounds = array<i64: 1, 32>}, {pipeline_mode = #tpu.pipeline_mode<synchronous>, transform_indices = @transform_9, window_bounds = array<i64: 32, 32>}, {pipeline_mode = #tpu.pipeline_mode<synchronous>, transform_indices = @transform_10, window_bounds = array<i64: 1, 32>}, {pipeline_mode = #tpu.pipeline_mode<synchronous>, transform_indices = @transform_11, window_bounds = array<i64: 64, 32>}]} {
    %c0 = arith.constant 0 : index
    %c0_0 = arith.constant 0 : index
    %0 = vector.load %arg1[%c0, %c0_0] : memref<64x3xf32, #tpu.memory_space<vmem>>, vector<64x3xf32>
    %c0_1 = arith.constant 0 : index
    %c0_2 = arith.constant 0 : index
    %1 = vector.load %arg2[%c0_1, %c0_2] : memref<3x32xf32, #tpu.memory_space<vmem>>, vector<3x32xf32>
    %2 = vector.extract_strided_slice %0 {offsets = [0, 0], sizes = [64, 1], strides = [1, 1]} : vector<64x3xf32> to vector<64x1xf32>
    %3 = vector.extract_strided_slice %1 {offsets = [0, 0], sizes = [1, 32], strides = [1, 1]} : vector<3x32xf32> to vector<1x32xf32>
    %4 = vector.broadcast %2 : vector<64x1xf32> to vector<64x32xf32>
    %5 = vector.broadcast %3 : vector<1x32xf32> to vector<64x32xf32>
    %6 = arith.mulf %4, %5 : vector<64x32xf32>
    %7 = vector.extract_strided_slice %0 {offsets = [0, 1], sizes = [64, 1], strides = [1, 1]} : vector<64x3xf32> to vector<64x1xf32>
    %8 = vector.extract_strided_slice %1 {offsets = [1, 0], sizes = [1, 32], strides = [1, 1]} : vector<3x32xf32> to vector<1x32xf32>
    %9 = vector.broadcast %7 : vector<64x1xf32> to vector<64x32xf32>
    %10 = vector.broadcast %8 : vector<1x32xf32> to vector<64x32xf32>
    %11 = arith.mulf %9, %10 : vector<64x32xf32>
    %12 = arith.addf %6, %11 : vector<64x32xf32>
    %13 = vector.extract_strided_slice %0 {offsets = [0, 2], sizes = [64, 1], strides = [1, 1]} : vector<64x3xf32> to vector<64x1xf32>
    %14 = vector.extract_strided_slice %1 {offsets = [2, 0], sizes = [1, 32], strides = [1, 1]} : vector<3x32xf32> to vector<1x32xf32>
    %15 = vector.broadcast %13 : vector<64x1xf32> to vector<64x32xf32>
    %16 = vector.broadcast %14 : vector<1x32xf32> to vector<64x32xf32>
    %17 = arith.mulf %15, %16 : vector<64x32xf32>
    %18 = arith.addf %12, %17 : vector<64x32xf32>
    %c0_3 = arith.constant 0 : index
    %c0_4 = arith.constant 0 : index
    %19 = vector.load %arg3[%c0_3, %c0_4] : memref<1x32xf32, #tpu.memory_space<vmem>>, vector<1x32xf32>
    %20 = vector.broadcast %19 : vector<1x32xf32> to vector<64x32xf32>
    %21 = arith.addf %18, %20 : vector<64x32xf32>
    %c0_5 = arith.constant 0 : index
    %c0_6 = arith.constant 0 : index
    %22 = vector.load %arg4[%c0_5, %c0_6] : memref<1x32xf32, #tpu.memory_space<vmem>>, vector<1x32xf32>
    %c0_7 = arith.constant 0 : index
    %c0_8 = arith.constant 0 : index
    %23 = vector.load %arg5[%c0_7, %c0_8] : memref<1x32xf32, #tpu.memory_space<vmem>>, vector<1x32xf32>
    %cst = arith.constant dense<0.000000e+00> : vector<32xf32>
    %24 = vector.multi_reduction <add>, %21, %cst [0] : vector<64x32xf32> to vector<32xf32>
    %25 = vector.shape_cast %24 : vector<32xf32> to vector<1x32xf32>
    %cst_9 = arith.constant 6.400000e+01 : f32
    %26 = vector.broadcast %cst_9 : f32 to vector<1x32xf32>
    %27 = arith.divf %25, %26 : vector<1x32xf32>
    %28 = vector.broadcast %27 : vector<1x32xf32> to vector<64x32xf32>
    %29 = arith.subf %21, %28 : vector<64x32xf32>
    %30 = arith.mulf %29, %29 : vector<64x32xf32>
    %cst_10 = arith.constant dense<0.000000e+00> : vector<32xf32>
    %31 = vector.multi_reduction <add>, %30, %cst_10 [0] : vector<64x32xf32> to vector<32xf32>
    %32 = vector.shape_cast %31 : vector<32xf32> to vector<1x32xf32>
    %cst_11 = arith.constant 6.400000e+01 : f32
    %33 = vector.broadcast %cst_11 : f32 to vector<1x32xf32>
    %34 = arith.divf %32, %33 : vector<1x32xf32>
    %35 = vector.broadcast %27 : vector<1x32xf32> to vector<64x32xf32>
    %36 = arith.subf %21, %35 : vector<64x32xf32>
    %cst_12 = arith.constant 9.99999974E-6 : f32
    %37 = vector.broadcast %cst_12 : f32 to vector<1x32xf32>
    %38 = arith.addf %34, %37 : vector<1x32xf32>
    %39 = math.rsqrt %38 : vector<1x32xf32>
    %40 = vector.broadcast %39 : vector<1x32xf32> to vector<64x32xf32>
    %41 = arith.mulf %36, %40 : vector<64x32xf32>
    %42 = vector.broadcast %22 : vector<1x32xf32> to vector<64x32xf32>
    %43 = arith.mulf %41, %42 : vector<64x32xf32>
    %44 = vector.broadcast %23 : vector<1x32xf32> to vector<64x32xf32>
    %45 = arith.addf %43, %44 : vector<64x32xf32>
    %cst_13 = arith.constant 0.000000e+00 : f32
    %46 = vector.broadcast %cst_13 : f32 to vector<64x32xf32>
    %47 = arith.maximumf %45, %46 : vector<64x32xf32>
    %48 = arith.truncf %47 : vector<64x32xf32> to vector<64x32xbf16>
    %c0_14 = arith.constant 0 : index
    %c0_15 = arith.constant 0 : index
    %49 = vector.load %arg6[%c0_14, %c0_15] : memref<32x32xbf16, #tpu.memory_space<vmem>>, vector<32x32xbf16>
    %cst_16 = arith.constant dense<0.000000e+00> : vector<64x32xf32>
    %50 = tpu.matmul %48, %49, %cst_16 {dimension_numbers = #tpu.dot_dimension_numbers<[1], [0], [0], [1], [0, 0, 1, 1], [], []>} : vector<64x32xbf16>, vector<32x32xbf16>, vector<64x32xf32> -> vector<64x32xf32>
    %c0_17 = arith.constant 0 : index
    %c0_18 = arith.constant 0 : index
    %51 = vector.load %arg7[%c0_17, %c0_18] : memref<1x32xf32, #tpu.memory_space<vmem>>, vector<1x32xf32>
    %52 = vector.broadcast %51 : vector<1x32xf32> to vector<64x32xf32>
    %53 = arith.addf %50, %52 : vector<64x32xf32>
    %c0_19 = arith.constant 0 : index
    %c0_20 = arith.constant 0 : index
    %54 = vector.load %arg8[%c0_19, %c0_20] : memref<1x32xf32, #tpu.memory_space<vmem>>, vector<1x32xf32>
    %c0_21 = arith.constant 0 : index
    %c0_22 = arith.constant 0 : index
    %55 = vector.load %arg9[%c0_21, %c0_22] : memref<1x32xf32, #tpu.memory_space<vmem>>, vector<1x32xf32>
    %cst_23 = arith.constant dense<0.000000e+00> : vector<32xf32>
    %56 = vector.multi_reduction <add>, %53, %cst_23 [0] : vector<64x32xf32> to vector<32xf32>
    %57 = vector.shape_cast %56 : vector<32xf32> to vector<1x32xf32>
    %cst_24 = arith.constant 6.400000e+01 : f32
    %58 = vector.broadcast %cst_24 : f32 to vector<1x32xf32>
    %59 = arith.divf %57, %58 : vector<1x32xf32>
    %60 = vector.broadcast %59 : vector<1x32xf32> to vector<64x32xf32>
    %61 = arith.subf %53, %60 : vector<64x32xf32>
    %62 = arith.mulf %61, %61 : vector<64x32xf32>
    %cst_25 = arith.constant dense<0.000000e+00> : vector<32xf32>
    %63 = vector.multi_reduction <add>, %62, %cst_25 [0] : vector<64x32xf32> to vector<32xf32>
    %64 = vector.shape_cast %63 : vector<32xf32> to vector<1x32xf32>
    %cst_26 = arith.constant 6.400000e+01 : f32
    %65 = vector.broadcast %cst_26 : f32 to vector<1x32xf32>
    %66 = arith.divf %64, %65 : vector<1x32xf32>
    %67 = vector.broadcast %59 : vector<1x32xf32> to vector<64x32xf32>
    %68 = arith.subf %53, %67 : vector<64x32xf32>
    %cst_27 = arith.constant 9.99999974E-6 : f32
    %69 = vector.broadcast %cst_27 : f32 to vector<1x32xf32>
    %70 = arith.addf %66, %69 : vector<1x32xf32>
    %71 = math.rsqrt %70 : vector<1x32xf32>
    %72 = vector.broadcast %71 : vector<1x32xf32> to vector<64x32xf32>
    %73 = arith.mulf %68, %72 : vector<64x32xf32>
    %74 = vector.broadcast %54 : vector<1x32xf32> to vector<64x32xf32>
    %75 = arith.mulf %73, %74 : vector<64x32xf32>
    %76 = vector.broadcast %55 : vector<1x32xf32> to vector<64x32xf32>
    %77 = arith.addf %75, %76 : vector<64x32xf32>
    %cst_28 = arith.constant 0.000000e+00 : f32
    %78 = vector.broadcast %cst_28 : f32 to vector<64x32xf32>
    %79 = arith.maximumf %77, %78 : vector<64x32xf32>
    %80 = arith.truncf %79 : vector<64x32xf32> to vector<64x32xbf16>
    %c0_29 = arith.constant 0 : index
    %c0_30 = arith.constant 0 : index
    %81 = vector.load %arg10[%c0_29, %c0_30] : memref<32x32xbf16, #tpu.memory_space<vmem>>, vector<32x32xbf16>
    %cst_31 = arith.constant dense<0.000000e+00> : vector<64x32xf32>
    %82 = tpu.matmul %80, %81, %cst_31 {dimension_numbers = #tpu.dot_dimension_numbers<[1], [0], [0], [1], [0, 0, 1, 1], [], []>} : vector<64x32xbf16>, vector<32x32xbf16>, vector<64x32xf32> -> vector<64x32xf32>
    %c0_32 = arith.constant 0 : index
    %c0_33 = arith.constant 0 : index
    %83 = vector.load %arg11[%c0_32, %c0_33] : memref<1x32xf32, #tpu.memory_space<vmem>>, vector<1x32xf32>
    %84 = vector.broadcast %83 : vector<1x32xf32> to vector<64x32xf32>
    %85 = arith.addf %82, %84 : vector<64x32xf32>
    %cst_34 = arith.constant 0.000000e+00 : f32
    %86 = vector.broadcast %cst_34 : f32 to vector<64x32xf32>
    %87 = arith.maximumf %85, %86 : vector<64x32xf32>
    %c0_35 = arith.constant 0 : index
    %c0_36 = arith.constant 0 : index
    %88 = vector.load %arg12[%c0_35, %c0_36] : memref<64x32xf32, #tpu.memory_space<vmem>>, vector<64x32xf32>
    tpu.vector_store %arg12[%c0_35, %c0_36], %87 {strides = array<i32>} : memref<64x32xf32, #tpu.memory_space<vmem>>, vector<64x32xf32>,
    return
  }
  func.func @transform_0(%arg0: i32) -> (i32, i32) {
    %c0_i32 = arith.constant 0 : i32
    %c0_i32_0 = arith.constant 0 : i32
    %c0_i32_1 = arith.constant 0 : i32
    return %c0_i32, %c0_i32_0 : i32, i32
  }
  func.func @transform_1(%arg0: i32) -> (i32, i32) {
    %c0_i32 = arith.constant 0 : i32
    %c0_i32_0 = arith.constant 0 : i32
    %c0_i32_1 = arith.constant 0 : i32
    return %c0_i32, %c0_i32_0 : i32, i32
  }
  func.func @transform_2(%arg0: i32) -> (i32, i32) {
    %c0_i32 = arith.constant 0 : i32
    %c0_i32_0 = arith.constant 0 : i32
    %c0_i32_1 = arith.constant 0 : i32
    return %c0_i32, %c0_i32_0 : i32, i32
  }
  func.func @transform_3(%arg0: i32) -> (i32, i32) {
    %c0_i32 = arith.constant 0 : i32
    %c0_i32_0 = arith.constant 0 : i32
    %c0_i32_1 = arith.constant 0 : i32
    return %c0_i32, %c0_i32_0 : i32, i32
  }
  func.func @transform_4(%arg0: i32) -> (i32, i32) {
    %c0_i32 = arith.constant 0 : i32
    %c0_i32_0 = arith.constant 0 : i32
    %c0_i32_1 = arith.constant 0 : i32
    return %c0_i32, %c0_i32_0 : i32, i32
  }
  func.func @transform_5(%arg0: i32) -> (i32, i32) {
    %c0_i32 = arith.constant 0 : i32
    %c0_i32_0 = arith.constant 0 : i32
    %c0_i32_1 = arith.constant 0 : i32
    return %c0_i32, %c0_i32_0 : i32, i32
  }
  func.func @transform_6(%arg0: i32) -> (i32, i32) {
    %c0_i32 = arith.constant 0 : i32
    %c0_i32_0 = arith.constant 0 : i32
    %c0_i32_1 = arith.constant 0 : i32
    return %c0_i32, %c0_i32_0 : i32, i32
  }
  func.func @transform_7(%arg0: i32) -> (i32, i32) {
    %c0_i32 = arith.constant 0 : i32
    %c0_i32_0 = arith.constant 0 : i32
    %c0_i32_1 = arith.constant 0 : i32
    return %c0_i32, %c0_i32_0 : i32, i32
  }
  func.func @transform_8(%arg0: i32) -> (i32, i32) {
    %c0_i32 = arith.constant 0 : i32
    %c0_i32_0 = arith.constant 0 : i32
    %c0_i32_1 = arith.constant 0 : i32
    return %c0_i32, %c0_i32_0 : i32, i32
  }
  func.func @transform_9(%arg0: i32) -> (i32, i32) {
    %c0_i32 = arith.constant 0 : i32
    %c0_i32_0 = arith.constant 0 : i32
    %c0_i32_1 = arith.constant 0 : i32
    return %c0_i32, %c0_i32_0 : i32, i32
  }
  func.func @transform_10(%arg0: i32) -> (i32, i32) {
    %c0_i32 = arith.constant 0 : i32
    %c0_i32_0 = arith.constant 0 : i32
    %c0_i32_1 = arith.constant 0 : i32
    return %c0_i32, %c0_i32_0 : i32, i32
  }
  func.func @transform_11(%arg0: i32) -> (i32, i32) {
    %c0_i32 = arith.constant 0 : i32
    %c0_i32_0 = arith.constant 0 : i32
    %c0_i32_1 = arith.constant 0 : i32
    return %c0_i32, %c0_i32_0 : i32, i32
  }
}

</mosaic_0001>

<llo_original>
// kernel: residual_transformer_head.1
$region0: #{residual_transformer_head.1}
  #allocation0 [shape = 'u32[]', space=smem, size = 0x4, offset = 0x4, fixed_abs, tag = 'smem constant byte address 0x4 - core index']
  #allocation1 [shape = 'u32[144,128]{1,0:T(1,128)}', space=vmem, size = 0x12000, scoped, tag = 'internal scratch']
  %s0 = inlined_call_operand.vmem [shape: f32[64,3], index: 0, kind: input, shape index: {}]
  %s1 = inlined_call_operand.vmem [shape: f32[3,32], index: 1, kind: input, shape index: {}]
  %s2 = inlined_call_operand.vmem [shape: f32[1,32], index: 2, kind: input, shape index: {}]
  %s3 = inlined_call_operand.vmem [shape: f32[1,32], index: 3, kind: input, shape index: {}]
  %s4 = inlined_call_operand.vmem [shape: f32[1,32], index: 4, kind: input, shape index: {}]
  %s5 = inlined_call_operand.vmem [shape: bf16[32,32], index: 5, kind: input, shape index: {}]
  %s6 = inlined_call_operand.vmem [shape: f32[1,32], index: 6, kind: input, shape index: {}]
  %s7 = inlined_call_operand.vmem [shape: f32[1,32], index: 7, kind: input, shape index: {}]
  %s8 = inlined_call_operand.vmem [shape: f32[1,32], index: 8, kind: input, shape index: {}]
  %s9 = inlined_call_operand.vmem [shape: bf16[32,32], index: 9, kind: input, shape index: {}]
  %s10 = inlined_call_operand.vmem [shape: f32[1,32], index: 10, kind: input, shape index: {}]
  %s11 = inlined_call_operand.vmem [shape: f32[64,32], index: 11, kind: output, shape index: {}]
  %s12 = sld [smem:[#allocation0]]
  $region54: #{residual_transformer_head.1} parent=0
    _
  %s14 = ssub.s32 1, %s12
  %s15 = scalar_select 0, %s14, %s12
  // Predicated region
  $region2: #{residual_transformer_head.1} parent=0 // pred_check
    _
  $region3: #{residual_transformer_head.1} parent=0 // pred_check_branch
    %17 = sbr.rel (0) target = $region5
  $region4: #{residual_transformer_head.1} parent=0 // pred_region
    _
  $region5: #{residual_transformer_head.1} parent=0 // pred_fallthru
    _
  // Predicated region
  $region6: #{residual_transformer_head.1} parent=0 // pred_check
    _
  $region7: #{residual_transformer_head.1} parent=0 // pred_check_branch
    %19 = sbr.rel (0) target = $region9
  $region8: #{residual_transformer_head.1} parent=0 // pred_region
    _
  $region9: #{residual_transformer_head.1} parent=0 // pred_fallthru
    _
  // Predicated region
  $region10: #{residual_transformer_head.1} parent=0 // pred_check
    _
  $region11: #{residual_transformer_head.1} parent=0 // pred_check_branch
    %21 = sbr.rel (0) target = $region13
  $region12: #{residual_transformer_head.1} parent=0 // pred_region
    _
  $region13: #{residual_transformer_head.1} parent=0 // pred_fallthru
    _
  // Predicated region
  $region14: #{residual_transformer_head.1} parent=0 // pred_check
    _
  $region15: #{residual_transformer_head.1} parent=0 // pred_check_branch
    %23 = sbr.rel (0) target = $region17
  $region16: #{residual_transformer_head.1} parent=0 // pred_region
    _
  $region17: #{residual_transformer_head.1} parent=0 // pred_fallthru
    _
  // Predicated region
  $region18: #{residual_transformer_head.1} parent=0 // pred_check
    _
  $region19: #{residual_transformer_head.1} parent=0 // pred_check_branch
    %25 = sbr.rel (0) target = $region21
  $region20: #{residual_transformer_head.1} parent=0 // pred_region
    _
  $region21: #{residual_transformer_head.1} parent=0 // pred_fallthru
    _
  // Predicated region
  $region22: #{residual_transformer_head.1} parent=0 // pred_check
    _
  $region23: #{residual_transformer_head.1} parent=0 // pred_check_branch
    %27 = sbr.rel (0) target = $region25
  $region24: #{residual_transformer_head.1} parent=0 // pred_region
    _
  $region25: #{residual_transformer_head.1} parent=0 // pred_fallthru
    _
  // Predicated region
  $region26: #{residual_transformer_head.1} parent=0 // pred_check
    _
  $region27: #{residual_transformer_head.1} parent=0 // pred_check_branch
    %29 = sbr.rel (0) target = $region29
  $region28: #{residual_transformer_head.1} parent=0 // pred_region
    _
  $region29: #{residual_transformer_head.1} parent=0 // pred_fallthru
    _
  // Predicated region
  $region30: #{residual_transformer_head.1} parent=0 // pred_check
    _
  $region31: #{residual_transformer_head.1} parent=0 // pred_check_branch
    %31 = sbr.rel (0) target = $region33
  $region32: #{residual_transformer_head.1} parent=0 // pred_region
    _
  $region33: #{residual_transformer_head.1} parent=0 // pred_fallthru
    _
  // Predicated region
  $region34: #{residual_transformer_head.1} parent=0 // pred_check
    _
  $region35: #{residual_transformer_head.1} parent=0 // pred_check_branch
    %33 = sbr.rel (0) target = $region37
  $region36: #{residual_transformer_head.1} parent=0 // pred_region
    _
  $region37: #{residual_transformer_head.1} parent=0 // pred_fallthru
    _
  // Predicated region
  $region38: #{residual_transformer_head.1} parent=0 // pred_check
    _
  $region39: #{residual_transformer_head.1} parent=0 // pred_check_branch
    %35 = sbr.rel (0) target = $region41
  $region40: #{residual_transformer_head.1} parent=0 // pred_region
    _
  $region41: #{residual_transformer_head.1} parent=0 // pred_fallthru
    _
  // Predicated region
  $region42: #{residual_transformer_head.1} parent=0 // pred_check
    _
  $region43: #{residual_transformer_head.1} parent=0 // pred_check_branch
    %37 = sbr.rel (0) target = $region45
  $region44: #{residual_transformer_head.1} parent=0 // pred_region
    _
  $region45: #{residual_transformer_head.1} parent=0 // pred_fallthru
    _
  %v39 = vld [vmem:[%s0] sm:$0xff]
  %v40 = vld [vmem:[%s0 + $0x8] sm:$0xff]
  %v41 = vld [vmem:[%s0 + $0x10] sm:$0xff]
  %v42 = vld [vmem:[%s0 + $0x18] sm:$0xff]
  %v43 = vld [vmem:[%s0 + $0x20] sm:$0xff]
  %v44 = vld [vmem:[%s0 + $0x28] sm:$0xff]
  %v45 = vld [vmem:[%s0 + $0x30] sm:$0xff]
  %v46 = vld [vmem:[%s0 + $0x38] sm:$0xff]
  %v47 = vld [vmem:[%s1] sm:$0x7]
  %49 = vset.pattern.permute.xlu0 0
  %50 = vperm.xlu0 %49, %v39
  %v51 = vpop.permute.xlu0 %50
  %54 = vset.pattern.permute.xlu0 0
  %55 = vperm.xlu0 %54, %v40
  %v56 = vpop.permute.xlu0 %55
  %59 = vset.pattern.permute.xlu0 0
  %60 = vperm.xlu0 %59, %v41
  %v61 = vpop.permute.xlu0 %60
  %64 = vset.pattern.permute.xlu0 0
  %65 = vperm.xlu0 %64, %v42
  %v66 = vpop.permute.xlu0 %65
  %69 = vset.pattern.permute.xlu0 0
  %70 = vperm.xlu0 %69, %v43
  %v71 = vpop.permute.xlu0 %70
  %74 = vset.pattern.permute.xlu0 0
  %75 = vperm.xlu0 %74, %v44
  %v76 = vpop.permute.xlu0 %75
  %79 = vset.pattern.permute.xlu0 0
  %80 = vperm.xlu0 %79, %v45
  %v81 = vpop.permute.xlu0 %80
  %84 = vset.pattern.permute.xlu0 0
  %85 = vperm.xlu0 %84, %v46
  %v86 = vpop.permute.xlu0 %85
  %v88 = vlaneseq
  %v89 = vshrl.u32 %v88, 7
  %v90 = vsub.s32 0, %v89
  %v91 = vrot.slane %v47, %v90
  %v92 = vmul.f32 %v51, %v91
  %v93 = vmul.f32 %v56, %v91
  %v94 = vmul.f32 %v61, %v91
  %v95 = vmul.f32 %v66, %v91
  %v96 = vmul.f32 %v71, %v91
  %v97 = vmul.f32 %v76, %v91
  %v98 = vmul.f32 %v81, %v91
  %v99 = vmul.f32 %v86, %v91
  %100 = vset.pattern.permute.xlu0 1
  %101 = vperm.xlu0 %100, %v39
  %v102 = vpop.permute.xlu0 %101
  %104 = vset.pattern.permute.xlu0 1
  %105 = vperm.xlu0 %104, %v40
  %v106 = vpop.permute.xlu0 %105
  %108 = vset.pattern.permute.xlu0 1
  %109 = vperm.xlu0 %108, %v41
  %v110 = vpop.permute.xlu0 %109
  %112 = vset.pattern.permute.xlu0 1
  %113 = vperm.xlu0 %112, %v42
  %v114 = vpop.permute.xlu0 %113
  %116 = vset.pattern.permute.xlu0 1
  %117 = vperm.xlu0 %116, %v43
  %v118 = vpop.permute.xlu0 %117
  %120 = vset.pattern.permute.xlu0 1
  %121 = vperm.xlu0 %120, %v44
  %v122 = vpop.permute.xlu0 %121
  %124 = vset.pattern.permute.xlu0 1
  %125 = vperm.xlu0 %124, %v45
  %v126 = vpop.permute.xlu0 %125
  %128 = vset.pattern.permute.xlu0 1
  %129 = vperm.xlu0 %128, %v46
  %v130 = vpop.permute.xlu0 %129
  %v132 = vlaneseq
  %v133 = vshrl.u32 %v132, 7
  %v134 = vsub.s32 1, %v133
  %v135 = vrot.slane %v47, %v134
  %v136 = vmul.f32 %v102, %v135
  %v137 = vmul.f32 %v106, %v135
  %v138 = vmul.f32 %v110, %v135
  %v139 = vmul.f32 %v114, %v135
  %v140 = vmul.f32 %v118, %v135
  %v141 = vmul.f32 %v122, %v135
  %v142 = vmul.f32 %v126, %v135
  %v143 = vmul.f32 %v130, %v135
  %v144 = vadd.f32 %v92, %v136
  %v145 = vadd.f32 %v93, %v137
  %v146 = vadd.f32 %v94, %v138
  %v147 = vadd.f32 %v95, %v139
  %v148 = vadd.f32 %v96, %v140
  %v149 = vadd.f32 %v97, %v141
  %v150 = vadd.f32 %v98, %v142
  %v151 = vadd.f32 %v99, %v143
  %152 = vset.pattern.permute.xlu0 2
  %153 = vperm.xlu0 %152, %v39
  %v154 = vpop.permute.xlu0 %153
  %156 = vset.pattern.permute.xlu0 2
  %157 = vperm.xlu0 %156, %v40
  %v158 = vpop.permute.xlu0 %157
  %160 = vset.pattern.permute.xlu0 2
  %161 = vperm.xlu0 %160, %v41
  %v162 = vpop.permute.xlu0 %161
  %164 = vset.pattern.permute.xlu0 2
  %165 = vperm.xlu0 %164, %v42
  %v166 = vpop.permute.xlu0 %165
  %168 = vset.pattern.permute.xlu0 2
  %169 = vperm.xlu0 %168, %v43
  %v170 = vpop.permute.xlu0 %169
  %172 = vset.pattern.permute.xlu0 2
  %173 = vperm.xlu0 %172, %v44
  %v174 = vpop.permute.xlu0 %173
  %176 = vset.pattern.permute.xlu0 2
  %177 = vperm.xlu0 %176, %v45
  %v178 = vpop.permute.xlu0 %177
  %180 = vset.pattern.permute.xlu0 2
  %181 = vperm.xlu0 %180, %v46
  %v182 = vpop.permute.xlu0 %181
  %v184 = vlaneseq
  %v185 = vshrl.u32 %v184, 7
  %v186 = vsub.s32 2, %v185
  %v187 = vrot.slane %v47, %v186
  %v188 = vmul.f32 %v154, %v187
  %v189 = vmul.f32 %v158, %v187
  %v190 = vmul.f32 %v162, %v187
  %v191 = vmul.f32 %v166, %v187
  %v192 = vmul.f32 %v170, %v187
  %v193 = vmul.f32 %v174, %v187
  %v194 = vmul.f32 %v178, %v187
  %v195 = vmul.f32 %v182, %v187
  %v196 = vadd.f32 %v144, %v188
  %v197 = vadd.f32 %v145, %v189
  %v198 = vadd.f32 %v146, %v190
  %v199 = vadd.f32 %v147, %v191
  %v200 = vadd.f32 %v148, %v192
  %v201 = vadd.f32 %v149, %v193
  %v202 = vadd.f32 %v150, %v194
  %v203 = vadd.f32 %v151, %v195
  %v204 = vld [vmem:[%s2] sm:$0x1]
  %v206 = vlaneseq
  %v207 = vshrl.u32 %v206, 7
  %v208 = vsub.s32 0, %v207
  %v209 = vrot.slane %v204, %v208
  %v211 = vadd.f32 %v196, %v209
  %v212 = vadd.f32 %v197, %v209
  %v213 = vadd.f32 %v198, %v209
  %v214 = vadd.f32 %v199, %v209
  %v215 = vadd.f32 %v200, %v209
  %v216 = vadd.f32 %v201, %v209
  %v217 = vadd.f32 %v202, %v209
  %v218 = vadd.f32 %v203, %v209
  %v219 = vld [vmem:[%s3] sm:$0x1]
  %v220 = vld [vmem:[%s4] sm:$0x1]
  %vm221 = vcmask 261120
  %v222 = vsel %vm221, %v211, 0.0
  %v223 = vsel %vm221, %v212, 0.0
  %v224 = vadd.f32 %v222, %v223
  %v225 = vsel %vm221, %v213, 0.0
  %v226 = vadd.f32 %v224, %v225
  %v227 = vsel %vm221, %v214, 0.0
  %v228 = vadd.f32 %v226, %v227
  %v229 = vsel %vm221, %v215, 0.0
  %v230 = vadd.f32 %v228, %v229
  %v231 = vsel %vm221, %v216, 0.0
  %v232 = vadd.f32 %v230, %v231
  %v233 = vsel %vm221, %v217, 0.0
  %v234 = vadd.f32 %v232, %v233
  %v235 = vsel %vm221, %v218, 0.0
  %v236 = vadd.f32 %v234, %v235
  %v237 = vrot.slane %v236, 4
  %v238 = vadd.f32 %v236, %v237
  %v239 = vrot.slane %v238, 2
  %v240 = vadd.f32 %v238, %v239
  %v241 = vrot.slane %v240, 1
  %v242 = vadd.f32 %v240, %v241
  %v243 = vrcp.pop 64.0
  %v244 = vmul.f32 %v242, %v243
  %v245 = vsub.f32 %v211, %v244
  %v246 = vsub.f32 %v212, %v244
  %v247 = vsub.f32 %v213, %v244
  %v248 = vsub.f32 %v214, %v244
  %v249 = vsub.f32 %v215, %v244
  %v250 = vsub.f32 %v216, %v244
  %v251 = vsub.f32 %v217, %v244
  %v252 = vsub.f32 %v218, %v244
  %v253 = vmul.f32 %v245, %v245
  %v254 = vmul.f32 %v246, %v246
  %v255 = vmul.f32 %v247, %v247
  %v256 = vmul.f32 %v248, %v248
  %v257 = vmul.f32 %v249, %v249
  %v258 = vmul.f32 %v250, %v250
  %v259 = vmul.f32 %v251, %v251
  %v260 = vmul.f32 %v252, %v252
  %v261 = vsel %vm221, %v253, 0.0
  %v262 = vsel %vm221, %v254, 0.0
  %v263 = vadd.f32 %v261, %v262
  %v264 = vsel %vm221, %v255, 0.0
  %v265 = vadd.f32 %v263, %v264
  %v266 = vsel %vm221, %v256, 0.0
  %v267 = vadd.f32 %v265, %v266
  %v268 = vsel %vm221, %v257, 0.0
  %v269 = vadd.f32 %v267, %v268
  %v270 = vsel %vm221, %v258, 0.0
  %v271 = vadd.f32 %v269, %v270
  %v272 = vsel %vm221, %v259, 0.0
  %v273 = vadd.f32 %v271, %v272
  %v274 = vsel %vm221, %v260, 0.0
  %v275 = vadd.f32 %v273, %v274
  %v276 = vrot.slane %v275, 4
  %v277 = vadd.f32 %v275, %v276
  %v278 = vrot.slane %v277, 2
  %v279 = vadd.f32 %v277, %v278
  %v280 = vrot.slane %v279, 1
  %v281 = vadd.f32 %v279, %v280
  %v282 = vmul.f32 %v281, %v243
  %v283 = vadd.f32 %v282, 1e-05
  %v284 = vrsqrt.pop %v283
  %v285 = vmul.f32 %v245, %v284
  %v286 = vmul.f32 %v246, %v284
  %v287 = vmul.f32 %v247, %v284
  %v288 = vmul.f32 %v248, %v284
  %v289 = vmul.f32 %v249, %v284
  %v290 = vmul.f32 %v250, %v284
  %v291 = vmul.f32 %v251, %v284
  %v292 = vmul.f32 %v252, %v284
  %v294 = vlaneseq
  %v295 = vshrl.u32 %v294, 7
  %v296 = vsub.s32 0, %v295
  %v297 = vrot.slane %v219, %v296
  %v299 = vmul.f32 %v285, %v297
  %v300 = vmul.f32 %v286, %v297
  %v301 = vmul.f32 %v287, %v297
  %v302 = vmul.f32 %v288, %v297
  %v303 = vmul.f32 %v289, %v297
  %v304 = vmul.f32 %v290, %v297
  %v305 = vmul.f32 %v291, %v297
  %v306 = vmul.f32 %v292, %v297
  %v308 = vlaneseq
  %v309 = vshrl.u32 %v308, 7
  %v310 = vsub.s32 0, %v309
  %v311 = vrot.slane %v220, %v310
  %v313 = vadd.f32 %v299, %v311
  %v314 = vadd.f32 %v300, %v311
  %v315 = vadd.f32 %v301, %v311
  %v316 = vadd.f32 %v302, %v311
  %v317 = vadd.f32 %v303, %v311
  %v318 = vadd.f32 %v304, %v311
  %v319 = vadd.f32 %v305, %v311
  %v320 = vadd.f32 %v306, %v311
  %v321 = vmax.f32 %v313, 0.0
  %v322 = vmax.f32 %v314, 0.0
  %v323 = vmax.f32 %v315, 0.0
  %v324 = vmax.f32 %v316, 0.0
  %v325 = vmax.f32 %v317, 0.0
  %v326 = vmax.f32 %v318, 0.0
  %v327 = vmax.f32 %v319, 0.0
  %v328 = vmax.f32 %v320, 0.0
  %v329 = vpack.c.bf16 %v322, %v321
  %v330 = vpack.c.bf16 %v324, %v323
  %v331 = vpack.c.bf16 %v326, %v325
  %v332 = vpack.c.bf16 %v328, %v327
  %v333 = vld [vmem:[%s5] sm:$0xf]
  %v334 = vld [vmem:[%s5 + $0x4] sm:$0xf]
  %v335 = vld [vmem:[%s5 + $0x8] sm:$0xf]
  %v336 = vld [vmem:[%s5 + $0xc] sm:$0xf]
  %v337 = vld [vmem:[%s6] sm:$0x1]
  %v339 = vlaneseq
  %v340 = vshrl.u32 %v339, 7
  %v341 = vsub.s32 0, %v340
  %v342 = vrot.slane %v337, %v341
  %v348 = vunpack.c.l.b16 %v333
  %v349 = vunpack.c.l.b16 %v334
  %v350 = vunpack.c.l.b16 %v335
  %v351 = vunpack.c.l.b16 %v336
  %v352 = vpack.c.b16 %v349, %v348
  %v353 = vpack.c.b16 %v351, %v350
  %v357 = vsel %vm221, %v329, 0
  %v360 = vsel %vm221, %v330, 0
  %v363 = vsel %vm221, %v331, 0
  %v366 = vsel %vm221, %v332, 0
  %368 = vmatprep.subr.bf16.mxu0 0
  %369 = vmatpush1.bf16.msra.mxu0 0
  %370 = vmatprep.subr.bf16.mxu0 0
  %371 = vmatpush1.bf16.msra.mxu0 0
  %372 = vmatprep.subr.bf16.mxu0 0
  %373 = vmatpush1.bf16.msra.mxu0 0
  %374 = vmatprep.subr.bf16.mxu0 0
  %375 = vmatpush1.bf16.msra.mxu0 0
  %376 = vmatprep.subr.bf16.mxu0 0
  %377 = vmatpush1.bf16.msra.mxu0 0
  %378 = vmatprep.subr.bf16.mxu0 0
  %379 = vmatpush1.bf16.msra.mxu0 0
  %380 = vmatprep.subr.bf16.mxu0 0
  %381 = vmatpush1.bf16.msra.mxu0 %v353
  %382 = vmatprep.subr.bf16.mxu0 0
  %383 = vmatpush1.bf16.msra.mxu0 %v352
  %384 = vmatprep.subr.bf16.mxu0 0
  %385 = vmatpush2.bf16.msra.mxu0 0
  %386 = vmatprep.subr.bf16.mxu0 0
  %387 = vmatpush2.bf16.msra.mxu0 0
  %388 = vmatprep.subr.bf16.mxu0 0
  %389 = vmatpush2.bf16.msra.mxu0 0
  %390 = vmatprep.subr.bf16.mxu0 0
  %391 = vmatpush2.bf16.msra.mxu0 0
  %392 = vmatprep.subr.bf16.mxu0 0
  %393 = vmatpush2.bf16.msra.mxu0 0
  %394 = vmatprep.subr.bf16.mxu0 0
  %395 = vmatpush2.bf16.msra.mxu0 0
  %396 = vmatprep.subr.bf16.mxu0 0
  %397 = vmatpush2.bf16.msra.mxu0 0
  %398 = vmatprep.subr.bf16.mxu0 0
  %399 = vmatpush2.bf16.msra.mxu0 0
  %400 = vmatprep.mubr.bf16.mxu0 0
  %401 = vmatmul.mubr.bf16.gmra.mxu0 %v357
  %v402 = vpop.f32.mrf.mxu0
  %v403 = vadd.f32 %v342, %v402
  %v404 = vpop.f32.mrf.mxu0
  %v405 = vpop.f32.mrf.mxu0
  %v406 = vadd.f32 %v342, %v405
  %v407 = vpop.f32.mrf.mxu0
  %408 = vmatprep.mubr.bf16.mxu0 0
  %409 = vmatmul.mubr.bf16.gmra.mxu0 %v360
  %v410 = vpop.f32.mrf.mxu0
  %v411 = vadd.f32 %v342, %v410
  %v412 = vpop.f32.mrf.mxu0
  %v413 = vpop.f32.mrf.mxu0
  %v414 = vadd.f32 %v342, %v413
  %v415 = vpop.f32.mrf.mxu0
  %416 = vmatprep.mubr.bf16.mxu0 0
  %417 = vmatmul.mubr.bf16.gmra.mxu0 %v363
  %v418 = vpop.f32.mrf.mxu0
  %v419 = vadd.f32 %v342, %v418
  %v420 = vpop.f32.mrf.mxu0
  %v421 = vpop.f32.mrf.mxu0
  %v422 = vadd.f32 %v342, %v421
  %v423 = vpop.f32.mrf.mxu0
  %424 = vmatprep.mubr.bf16.mxu0 0
  %425 = vmatmul.mubr.bf16.gmra.mxu0 %v366
  %v426 = vpop.f32.mrf.mxu0
  %v427 = vadd.f32 %v342, %v426
  %v428 = vpop.f32.mrf.mxu0
  %v429 = vpop.f32.mrf.mxu0
  %v430 = vadd.f32 %v342, %v429
  %v431 = vpop.f32.mrf.mxu0
  %432 = vdwg.mxu0
  %v433 = vld [vmem:[%s7] sm:$0x1]
  %v434 = vld [vmem:[%s8] sm:$0x1]
  %v435 = vsel %vm221, %v403, 0.0
  %v436 = vsel %vm221, %v406, 0.0
  %v437 = vadd.f32 %v435, %v436
  %v438 = vsel %vm221, %v411, 0.0
  %v439 = vadd.f32 %v437, %v438
  %v440 = vsel %vm221, %v414, 0.0
  %v441 = vadd.f32 %v439, %v440
  %v442 = vsel %vm221, %v419, 0.0
  %v443 = vadd.f32 %v441, %v442
  %v444 = vsel %vm221, %v422, 0.0
  %v445 = vadd.f32 %v443, %v444
  %v446 = vsel %vm221, %v427, 0.0
  %v447 = vadd.f32 %v445, %v446
  %v448 = vsel %vm221, %v430, 0.0
  %v449 = vadd.f32 %v447, %v448
  %v450 = vrot.slane %v449, 4
  %v451 = vadd.f32 %v449, %v450
  %v452 = vrot.slane %v451, 2
  %v453 = vadd.f32 %v451, %v452
  %v454 = vrot.slane %v453, 1
  %v455 = vadd.f32 %v453, %v454
  %v456 = vmul.f32 %v455, %v243
  %v457 = vsub.f32 %v403, %v456
  %v458 = vsub.f32 %v406, %v456
  %v459 = vsub.f32 %v411, %v456
  %v460 = vsub.f32 %v414, %v456
  %v461 = vsub.f32 %v419, %v456
  %v462 = vsub.f32 %v422, %v456
  %v463 = vsub.f32 %v427, %v456
  %v464 = vsub.f32 %v430, %v456
  %v465 = vmul.f32 %v457, %v457
  %v466 = vmul.f32 %v458, %v458
  %v467 = vmul.f32 %v459, %v459
  %v468 = vmul.f32 %v460, %v460
  %v469 = vmul.f32 %v461, %v461
  %v470 = vmul.f32 %v462, %v462
  %v471 = vmul.f32 %v463, %v463
  %v472 = vmul.f32 %v464, %v464
  %v473 = vsel %vm221, %v465, 0.0
  %v474 = vsel %vm221, %v466, 0.0
  %v475 = vadd.f32 %v473, %v474
  %v476 = vsel %vm221, %v467, 0.0
  %v477 = vadd.f32 %v475, %v476
  %v478 = vsel %vm221, %v468, 0.0
  %v479 = vadd.f32 %v477, %v478
  %v480 = vsel %vm221, %v469, 0.0
  %v481 = vadd.f32 %v479, %v480
  %v482 = vsel %vm221, %v470, 0.0
  %v483 = vadd.f32 %v481, %v482
  %v484 = vsel %vm221, %v471, 0.0
  %v485 = vadd.f32 %v483, %v484
  %v486 = vsel %vm221, %v472, 0.0
  %v487 = vadd.f32 %v485, %v486
  %v488 = vrot.slane %v487, 4
  %v489 = vadd.f32 %v487, %v488
  %v490 = vrot.slane %v489, 2
  %v491 = vadd.f32 %v489, %v490
  %v492 = vrot.slane %v491, 1
  %v493 = vadd.f32 %v491, %v492
  %v494 = vmul.f32 %v493, %v243
  %v495 = vadd.f32 %v494, 1e-05
  %v496 = vrsqrt.pop %v495
  %v497 = vmul.f32 %v457, %v496
  %v498 = vmul.f32 %v458, %v496
  %v499 = vmul.f32 %v459, %v496
  %v500 = vmul.f32 %v460, %v496
  %v501 = vmul.f32 %v461, %v496
  %v502 = vmul.f32 %v462, %v496
  %v503 = vmul.f32 %v463, %v496
  %v504 = vmul.f32 %v464, %v496
  %v506 = vlaneseq
  %v507 = vshrl.u32 %v506, 7
  %v508 = vsub.s32 0, %v507
  %v509 = vrot.slane %v433, %v508
  %v511 = vmul.f32 %v497, %v509
  %v512 = vmul.f32 %v498, %v509
  %v513 = vmul.f32 %v499, %v509
  %v514 = vmul.f32 %v500, %v509
  %v515 = vmul.f32 %v501, %v509
  %v516 = vmul.f32 %v502, %v509
  %v517 = vmul.f32 %v503, %v509
  %v518 = vmul.f32 %v504, %v509
  %v520 = vlaneseq
  %v521 = vshrl.u32 %v520, 7
  %v522 = vsub.s32 0, %v521
  %v523 = vrot.slane %v434, %v522
  %v525 = vadd.f32 %v511, %v523
  %v526 = vadd.f32 %v512, %v523
  %v527 = vadd.f32 %v513, %v523
  %v528 = vadd.f32 %v514, %v523
  %v529 = vadd.f32 %v515, %v523
  %v530 = vadd.f32 %v516, %v523
  %v531 = vadd.f32 %v517, %v523
  %v532 = vadd.f32 %v518, %v523
  %v533 = vmax.f32 %v525, 0.0
  %v534 = vmax.f32 %v526, 0.0
  %v535 = vmax.f32 %v527, 0.0
  %v536 = vmax.f32 %v528, 0.0
  %v537 = vmax.f32 %v529, 0.0
  %v538 = vmax.f32 %v530, 0.0
  %v539 = vmax.f32 %v531, 0.0
  %v540 = vmax.f32 %v532, 0.0
  %v541 = vpack.c.bf16 %v534, %v533
  %v542 = vpack.c.bf16 %v536, %v535
  %v543 = vpack.c.bf16 %v538, %v537
  %v544 = vpack.c.bf16 %v540, %v539
  %v545 = vld [vmem:[%s9] sm:$0xf]
  %v546 = vld [vmem:[%s9 + $0x4] sm:$0xf]
  %v547 = vld [vmem:[%s9 + $0x8] sm:$0xf]
  %v548 = vld [vmem:[%s9 + $0xc] sm:$0xf]
  %v549 = vld [vmem:[%s10] sm:$0x1]
  %v551 = vlaneseq
  %v552 = vshrl.u32 %v551, 7
  %v553 = vsub.s32 0, %v552
  %v554 = vrot.slane %v549, %v553
  %v560 = vunpack.c.l.b16 %v545
  %v561 = vunpack.c.l.b16 %v546
  %v562 = vunpack.c.l.b16 %v547
  %v563 = vunpack.c.l.b16 %v548
  %v564 = vpack.c.b16 %v561, %v560
  %v565 = vpack.c.b16 %v563, %v562
  %v569 = vsel %vm221, %v541, 0
  %v572 = vsel %vm221, %v542, 0
  %v575 = vsel %vm221, %v543, 0
  %v578 = vsel %vm221, %v544, 0
  %580 = vmatprep.subr.bf16.mxu0 0
  %581 = vmatpush1.bf16.msra.mxu0 0
  %582 = vmatprep.subr.bf16.mxu0 0
  %583 = vmatpush1.bf16.msra.mxu0 0
  %584 = vmatprep.subr.bf16.mxu0 0
  %585 = vmatpush1.bf16.msra.mxu0 0
  %586 = vmatprep.subr.bf16.mxu0 0
  %587 = vmatpush1.bf16.msra.mxu0 0
  %588 = vmatprep.subr.bf16.mxu0 0
  %589 = vmatpush1.bf16.msra.mxu0 0
  %590 = vmatprep.subr.bf16.mxu0 0
  %591 = vmatpush1.bf16.msra.mxu0 0
  %592 = vmatprep.subr.bf16.mxu0 0
  %593 = vmatpush1.bf16.msra.mxu0 %v565
  %594 = vmatprep.subr.bf16.mxu0 0
  %595 = vmatpush1.bf16.msra.mxu0 %v564
  %596 = vmatprep.subr.bf16.mxu0 0
  %597 = vmatpush2.bf16.msra.mxu0 0
  %598 = vmatprep.subr.bf16.mxu0 0
  %599 = vmatpush2.bf16.msra.mxu0 0
  %600 = vmatprep.subr.bf16.mxu0 0
  %601 = vmatpush2.bf16.msra.mxu0 0
  %602 = vmatprep.subr.bf16.mxu0 0
  %603 = vmatpush2.bf16.msra.mxu0 0
  %604 = vmatprep.subr.bf16.mxu0 0
  %605 = vmatpush2.bf16.msra.mxu0 0
  %606 = vmatprep.subr.bf16.mxu0 0
  %607 = vmatpush2.bf16.msra.mxu0 0
  %608 = vmatprep.subr.bf16.mxu0 0
  %609 = vmatpush2.bf16.msra.mxu0 0
  %610 = vmatprep.subr.bf16.mxu0 0
  %611 = vmatpush2.bf16.msra.mxu0 0
  %612 = vmatprep.mubr.bf16.mxu0 0
  %613 = vmatmul.mubr.bf16.gmra.mxu0 %v569
  %v614 = vpop.f32.mrf.mxu0
  %v615 = vadd.f32 %v554, %v614
  %v616 = vpop.f32.mrf.mxu0
  %v617 = vpop.f32.mrf.mxu0
  %v618 = vadd.f32 %v554, %v617
  %v619 = vpop.f32.mrf.mxu0
  %620 = vmatprep.mubr.bf16.mxu0 0
  %621 = vmatmul.mubr.bf16.gmra.mxu0 %v572
  %v622 = vpop.f32.mrf.mxu0
  %v623 = vadd.f32 %v554, %v622
  %v624 = vpop.f32.mrf.mxu0
  %v625 = vpop.f32.mrf.mxu0
  %v626 = vadd.f32 %v554, %v625
  %v627 = vpop.f32.mrf.mxu0
  %628 = vmatprep.mubr.bf16.mxu0 0
  %629 = vmatmul.mubr.bf16.gmra.mxu0 %v575
  %v630 = vpop.f32.mrf.mxu0
  %v631 = vadd.f32 %v554, %v630
  %v632 = vpop.f32.mrf.mxu0
  %v633 = vpop.f32.mrf.mxu0
  %v634 = vadd.f32 %v554, %v633
  %v635 = vpop.f32.mrf.mxu0
  %636 = vmatprep.mubr.bf16.mxu0 0
  %637 = vmatmul.mubr.bf16.gmra.mxu0 %v578
  %v638 = vpop.f32.mrf.mxu0
  %v639 = vadd.f32 %v554, %v638
  %v640 = vpop.f32.mrf.mxu0
  %v641 = vpop.f32.mrf.mxu0
  %v642 = vadd.f32 %v554, %v641
  %v643 = vpop.f32.mrf.mxu0
  %644 = vdwg.mxu0
  %v645 = vmax.f32 %v615, 0.0
  %v646 = vmax.f32 %v618, 0.0
  %v647 = vmax.f32 %v623, 0.0
  %v648 = vmax.f32 %v626, 0.0
  %v649 = vmax.f32 %v631, 0.0
  %v650 = vmax.f32 %v634, 0.0
  %v651 = vmax.f32 %v639, 0.0
  %v652 = vmax.f32 %v642, 0.0
  %653 = vst.msk [vmem:[%s11] sm:$0xff] %vm221, %v645
  %654 = vst.msk [vmem:[%s11 + $0x8] sm:$0xff] %vm221, %v646
  %655 = vst.msk [vmem:[%s11 + $0x10] sm:$0xff] %vm221, %v647
  %656 = vst.msk [vmem:[%s11 + $0x18] sm:$0xff] %vm221, %v648
  %657 = vst.msk [vmem:[%s11 + $0x20] sm:$0xff] %vm221, %v649
  %658 = vst.msk [vmem:[%s11 + $0x28] sm:$0xff] %vm221, %v650
  %659 = vst.msk [vmem:[%s11 + $0x30] sm:$0xff] %vm221, %v651
  %660 = vst.msk [vmem:[%s11 + $0x38] sm:$0xff] %vm221, %v652
  // Predicated region
  $region46: #{residual_transformer_head.1} parent=0 // pred_check
    _
  $region47: #{residual_transformer_head.1} parent=0 // pred_check_branch
    %662 = sbr.rel (0) target = $region49
  $region48: #{residual_transformer_head.1} parent=0 // pred_region
    _
  $region49: #{residual_transformer_head.1} parent=0 // pred_fallthru
    _
  // Predicated region
  $region50: #{residual_transformer_head.1} parent=0 // pred_check
    _
  $region51: #{residual_transformer_head.1} parent=0 // pred_check_branch
    %664 = sbr.rel (0) target = $region53
  $region52: #{residual_transformer_head.1} parent=0 // pred_region
    _
  $region53: #{residual_transformer_head.1} parent=0 // pred_fallthru
    _

</llo_original>
